<compile_context>
chip_gen: v5e
topology: v5e:2x2
jax: 0.10.0
libtpu: 0.0.40
codegen_flags: <defaults>
</compile_context>

<pallas_src>
import jax
import jax.numpy as jnp
from jax.experimental import pallas as pl
from jax.experimental.pallas import tpu as pltpu


def _swish_kernel(x_ref, o_ref):
    # swish(x) = x * sigmoid(x); sigmoid via a single EUP tanh, no divide.
    x = x_ref[...].astype(jnp.float32)
    sig = 0.5 * (jnp.tanh(0.5 * x) + 1.0)
    o_ref[...] = (x * sig).astype(o_ref.dtype)


def _cdiv(a, b):
    return -(-a // b)


def _row_align(dtype) -> int:
    # Native sublane tile height: 8 rows for 32-bit, 16 for 16-bit, 32 for 8-bit.
    return max(8, 32 // jnp.dtype(dtype).itemsize)


def _choose_slab(n, row_align):
    """Pick a lane-dense (rows, width) reachable by a metadata-only reshape."""
    widths = (4096, 2048, 1024, 512, 256, 128)
    # Preferred: rows a multiple of the native sublane tile height.
    for width in widths:
        if n % width == 0 and (n // width) % row_align == 0:
            return n // width, width
    # Tiny arrays: a single block equal to the full array dims is allowed.
    for width in widths:
        if n % width == 0 and (n // width) < row_align:
            return n // width, width
    return None


def _pick_block_rows(rows, width, itemsize, row_align, target_block_bytes):
    if rows <= row_align:
        return rows  # single full-array block (exempt from (8,128) rule)
    max_rows = (target_block_bytes // (width * itemsize)) // row_align * row_align
    block_rows = min(rows, max(row_align, max_rows))
    # Force an even grid (>= 2 blocks) so the "parallel" axis shards evenly
    # across v7x's two TensorCores; harmless on 1-TC chips.
    num_blocks = _cdiv(rows, block_rows)
    if num_blocks % 2 == 1:
        num_blocks += 1
        block_rows = max(row_align, _cdiv(_cdiv(rows, num_blocks), row_align) * row_align)
    return block_rows


def _swish_2d(x2d, block_rows, donate):
    rows, width = x2d.shape
    grid = (_cdiv(rows, block_rows),)
    return pl.pallas_call(
        _swish_kernel,
        out_shape=jax.ShapeDtypeStruct((rows, width), x2d.dtype),
        grid_spec=pltpu.PrefetchScalarGridSpec(
            num_scalar_prefetch=0,
            grid=grid,
            in_specs=[pl.BlockSpec((block_rows, width), lambda i: (i, 0))],
            out_specs=pl.BlockSpec((block_rows, width), lambda i: (i, 0)),
        ),
        compiler_params=pltpu.CompilerParams(
            dimension_semantics=("parallel",),
            vmem_limit_bytes=32 * 1024 * 1024,  # 4 MiB blocks safe even on v5e
        ),
        input_output_aliases=({0: 0} if donate else {}),
    )(x2d)


def swish(x: jax.Array, *, target_block_bytes: int = 4 * 1024 * 1024,
          donate: bool = False) -> jax.Array:
    """Elementwise Swish (x * sigmoid(x)) on an arbitrary-shaped array (e.g. NCHW)."""
    orig_shape = x.shape
    n = x.size
    itemsize = jnp.dtype(x.dtype).itemsize
    row_align = _row_align(x.dtype)

    slab = _choose_slab(n, row_align)
    if slab is not None:
        rows, width = slab
        block_rows = _pick_block_rows(rows, width, itemsize, row_align,
                                      target_block_bytes)
        out2d = _swish_2d(x.reshape(rows, width), block_rows, donate)
        return out2d.reshape(orig_shape)

    # Ragged size: kernel over the largest aligned prefix, plain jnp tail.
    # (Avoids the previous pad + slice round trip = two extra full HBM passes.)
    flat = x.reshape(-1)
    width = 128
    tile_elems = width * row_align
    n_main = (n // tile_elems) * tile_elems
    if n_main == 0:
        # Smaller than one native tile: not worth a kernel launch.
        return (flat * jax.nn.sigmoid(flat)).reshape(orig_shape)
    rows = n_main // width
    block_rows = _pick_block_rows(rows, width, itemsize, row_align,
                                  target_block_bytes)
    main_out = _swish_2d(flat[:n_main].reshape(rows, width), block_rows,
                         donate).reshape(-1)
    tail = flat[n_main:]
    tail_out = tail * jax.nn.sigmoid(tail)
    return jnp.concatenate([main_out, tail_out]).reshape(orig_shape)


if __name__ == "__main__":
    key = jax.random.PRNGKey(0)
    # NCHW, matching PyTorch conv conventions: batch=2, channels=4, 16x16.
    x = jax.random.normal(key, (2, 4, 16, 16), dtype=jnp.float32)

    y = jax.block_until_ready(swish(x))

    # Reference check against plain JAX.
    y_ref = x * jax.nn.sigmoid(x)
    assert y.shape == x.shape and y.dtype == x.dtype
    assert jnp.max(jnp.abs(y - y_ref)) < 1e-5

    print("KERNEL_OK")
</pallas_src>

<mosaic_0001>
module attributes {stable_mosaic.version = 11 : i64} {
  func.func @_swish_kernel(%arg0: i32, %arg1: memref<8x256xf32, #tpu.memory_space<vmem>>, %arg2: memref<8x256xf32, #tpu.memory_space<vmem>>) attributes {dimension_semantics = [#tpu.dimension_semantics<parallel>], iteration_bounds = array<i64: 1>, scalar_prefetch = 0 : i64, scratch_operands = 0 : i64, tpu.core_type = #tpu.core_type<tc>, window_params = [{transform_indices = @transform_0, window_bounds = array<i64: 8, 256>}, {transform_indices = @transform_1, window_bounds = array<i64: 8, 256>}]} {
    %c0 = arith.constant 0 : index
    %c0_0 = arith.constant 0 : index
    %0 = vector.load %arg1[%c0, %c0_0] : memref<8x256xf32, #tpu.memory_space<vmem>>, vector<8x256xf32>
    %cst = arith.constant 5.000000e-01 : f32
    %1 = vector.broadcast %cst : f32 to vector<8x256xf32>
    %2 = arith.mulf %1, %0 : vector<8x256xf32>
    %3 = math.tanh %2 : vector<8x256xf32>
    %cst_1 = arith.constant 1.000000e+00 : f32
    %4 = vector.broadcast %cst_1 : f32 to vector<8x256xf32>
    %5 = arith.addf %3, %4 : vector<8x256xf32>
    %cst_2 = arith.constant 5.000000e-01 : f32
    %6 = vector.broadcast %cst_2 : f32 to vector<8x256xf32>
    %7 = arith.mulf %6, %5 : vector<8x256xf32>
    %8 = arith.mulf %0, %7 : vector<8x256xf32>
    %c0_3 = arith.constant 0 : index
    %c0_4 = arith.constant 0 : index
    %9 = vector.load %arg2[%c0_3, %c0_4] : memref<8x256xf32, #tpu.memory_space<vmem>>, vector<8x256xf32>
    tpu.vector_store %arg2[%c0_3, %c0_4], %8 {strides = array<i32>} : memref<8x256xf32, #tpu.memory_space<vmem>>, vector<8x256xf32>,
    return
  }
  func.func @transform_0(%arg0: i32) -> (i32, i32) {
    %c0_i32 = arith.constant 0 : i32
    %c0_i32_0 = arith.constant 0 : i32
    return %arg0, %c0_i32 : i32, i32
  }
  func.func @transform_1(%arg0: i32) -> (i32, i32) {
    %c0_i32 = arith.constant 0 : i32
    %c0_i32_0 = arith.constant 0 : i32
    return %arg0, %c0_i32 : i32, i32
  }
}

</mosaic_0001>

<llo_original>
// kernel: tpu_custom_call.1
$region0: #{tpu_custom_call.1}
  #allocation0 [shape = 'u32[]', space=smem, size = 0x4, offset = 0x4, fixed_abs, tag = 'smem constant byte address 0x4 - core index']
  #allocation1 [shape = 'u32[72,128]{1,0:T(1,128)}', space=vmem, size = 0x9000, scoped, tag = 'internal scratch']
  %s0 = inlined_call_operand.hbm [shape: f32[8,256], index: 0, kind: input, shape index: {}]
  %s1 = inlined_call_operand.hbm [shape: f32[8,256], index: 1, kind: output, shape index: {}]
  %s2 = sld [smem:[#allocation0]]
  $region18: #{tpu_custom_call.1} parent=0
    _
  %s4 = ssub.s32 1, %s2
  %s5 = scalar_select 0, %s4, %s2
  $region1: #{tpu_custom_call.1} parent=0
    #allocation2 [shape = 'u8[8192]{0}', space=vmem, size = 0x2000, scoped, tag = 'input window, operand 0, single buffered']
    #allocation3 [shape = 's32[1]{0}', space=sflag, size = 0x4, scoped, tag = 'scoped memory for tpu_custom_call.1']
    #allocation4 [shape = 's32[1]{0}', space=sflag, size = 0x4, scoped, tag = 'scoped memory for tpu_custom_call.1']
    #allocation5 [shape = 'u8[8192]{0}', space=vmem, size = 0x2000, scoped, tag = 'output window, operand 0, single buffered']
    %6 = vsyncpa [#allocation3], 0
    %7 = vsyncpa [#allocation4], 0
    // Predicated region
    $region2: #{tpu_custom_call.1} parent=1 // pred_check
      _
    $region3: #{tpu_custom_call.1} parent=1 // pred_check_branch
      %9 = sbr.rel (0) target = $region5
    $region4: #{tpu_custom_call.1} parent=1 // pred_region
      %11 = vsyncadd [#allocation3], 0
      %s13 = sshll.u32 %s0, 4
      %s14 = int_to_ptr.hbm [resolvable:$true] %s13
      %s15 = sshll.u32 [#allocation2], 4
      %s16 = int_to_ptr.vmem [resolvable:$true] %s15
      %18 = dma.hbm_to_vmem [thread:$0]  %s14, 256, %s16, [#allocation3]
    $region5: #{tpu_custom_call.1} parent=1 // pred_fallthru
      _
    // Predicated region
    $region6: #{tpu_custom_call.1} parent=1 // pred_check
      _
    $region7: #{tpu_custom_call.1} parent=1 // pred_check_branch
      %20 = sbr.rel (0) target = $region9
    $region8: #{tpu_custom_call.1} parent=1 // pred_region
      %22 = dma.done [#allocation3], 256
    $region9: #{tpu_custom_call.1} parent=1 // pred_fallthru
      _
    %v23 = vld [vmem:[#allocation2] sm:$0xff]
    %v24 = vld [vmem:[#allocation2 + $0x8] sm:$0xff]
    %v25 = vmul.f32 %v23, 0.5
    %v26 = vmul.f32 %v24, 0.5
    %v27 = vtanh.pop %v25
    %v28 = vtanh.pop %v26
    %v29 = vadd.f32 %v27, 1.0
    %v30 = vadd.f32 %v28, 1.0
    %v31 = vmul.f32 %v29, 0.5
    %v32 = vmul.f32 %v30, 0.5
    %v33 = vmul.f32 %v23, %v31
    %v34 = vmul.f32 %v24, %v32
    %35 = vst [vmem:[#allocation5] sm:$0xff] %v33
    %36 = vst [vmem:[#allocation5 + $0x8] sm:$0xff] %v34
    // Predicated region
    $region10: #{tpu_custom_call.1} parent=1 // pred_check
      _
    $region11: #{tpu_custom_call.1} parent=1 // pred_check_branch
      %38 = sbr.rel (0) target = $region13
    $region12: #{tpu_custom_call.1} parent=1 // pred_region
      %40 = vsyncadd [#allocation4], 0
      %s42 = sshll.u32 [#allocation5], 4
      %s43 = int_to_ptr.vmem [resolvable:$true] %s42
      %s44 = sshll.u32 %s1, 4
      %s45 = int_to_ptr.hbm [resolvable:$true] %s44
      %47 = dma.vmem_to_hbm [thread:$0]  %s43, 256, %s45, [#allocation4]
    $region13: #{tpu_custom_call.1} parent=1 // pred_fallthru
      _
    // Predicated region
    $region14: #{tpu_custom_call.1} parent=1 // pred_check
      _
    $region15: #{tpu_custom_call.1} parent=1 // pred_check_branch
      %49 = sbr.rel (0) target = $region17
    $region16: #{tpu_custom_call.1} parent=1 // pred_region
      %51 = dma.done [#allocation4], 256
    $region17: #{tpu_custom_call.1} parent=1 // pred_fallthru
      _
    %52 = vsyncpa [#allocation3], 1
    %53 = vsyncpa [#allocation4], 1

</llo_original>
